<compile_context>
chip_gen: v6e
topology: v6e:2x2x1
jax: 0.10.0
libtpu: 0.0.40
codegen_flags: <defaults>
</compile_context>

<pallas_src>
import functools
import numpy as np

import jax
import jax.numpy as jnp
from jax.experimental import pallas as pl
from jax.experimental.pallas import tpu as pltpu


# ----------------------------------------------------------------------------
# Glue (pure reshapes / constants) — plain JAX / numpy
# ----------------------------------------------------------------------------
def get_positional_encoding(seq_len, hidden_d):
    position = np.arange(seq_len, dtype=np.float32)[:, None]
    div_term = np.exp(
        np.arange(0, hidden_d, 2, dtype=np.float32) * (-np.log(10000.0) / hidden_d)
    )
    pe = np.zeros((seq_len, hidden_d), dtype=np.float32)
    pe[:, 0::2] = np.sin(position * div_term)
    pe[:, 1::2] = np.cos(position * div_term)
    return jnp.asarray(pe)


def patchify(image_list, n_patches):
    # image_list: (N, S, C, H, W)  ->  (N, S * n_patches^2, C * ps * ps)
    n, s, c, h, w = image_list.shape
    assert h == w, "Patchify method is implemented for square images only"
    ps = h // n_patches
    x = image_list.reshape(n * s, c, n_patches, ps, n_patches, ps)
    # match torch .unfold().unfold().permute(0,2,3,1,4,5)
    x = jnp.transpose(x, (0, 2, 4, 1, 3, 5))          # (NS, np, np, C, ps, ps)
    x = x.reshape(n * s, n_patches * n_patches, c * ps * ps)
    return x.reshape(n, s * n_patches * n_patches, c * ps * ps)


# ----------------------------------------------------------------------------
# Kernel 1: patch linear mapper — whole batch folded into one matmul
# ----------------------------------------------------------------------------
def linear_mapper_kernel(p_ref, w_ref, b_ref, o_ref):
    x = p_ref[...].astype(jnp.bfloat16)               # bf16 MXU operands
    o_ref[...] = (
        jnp.dot(x, w_ref[...], preferred_element_type=jnp.float32) + b_ref[...]
    )


def linear_mapper(patches_2d, w, b, row_tile=512):
    M, PD = patches_2d.shape
    D = w.shape[1]
    if M % row_tile != 0:
        row_tile = M                                   # toy sizes: single tile
    return pl.pallas_call(
        linear_mapper_kernel,
        out_shape=jax.ShapeDtypeStruct((M, D), jnp.float32),
        grid=(M // row_tile,),
        in_specs=[
            pl.BlockSpec((row_tile, PD), lambda i: (i, 0)),
            pl.BlockSpec((PD, D), lambda i: (0, 0)),
            pl.BlockSpec((1, D), lambda i: (0, 0)),
        ],
        out_specs=pl.BlockSpec((row_tile, D), lambda i: (i, 0)),
        compiler_params=pltpu.CompilerParams(
            dimension_semantics=("parallel",),
            vmem_limit_bytes=48 * 1024 * 1024,
        ),
    )(patches_2d, w, b)


# ----------------------------------------------------------------------------
# Kernel 2: ALL ViT encoder blocks, one pallas_call.
#   grid = (N, L): batch "parallel", layer "arbitrary" (last).
#   Tokens are carried across layers in VMEM scratch (no HBM round-trips).
# ----------------------------------------------------------------------------
def vit_block_kernel(
    x_ref,
    ln1_w_ref, ln1_b_ref,
    wq_ref, bq_ref, wk_ref, bk_ref, wv_ref, bv_ref,
    ln2_w_ref, ln2_b_ref,
    w1_ref, b1_ref, w2_ref, b2_ref,
    o_ref,
    carry_ref,
    *, n_heads,
):
    layer = pl.program_id(1)
    n_layers = pl.num_programs(1)

    # Layer 0 of each sample: load the pos-encoded input tokens into the
    # VMEM carry; later layers read/update the carry only.
    @pl.when(layer == 0)
    def _():
        carry_ref[...] = x_ref[0]

    x = carry_ref[...]                                 # (T, D) f32
    T, D = x.shape
    H = n_heads
    dh = D // H
    eps = 1e-5
    bf16 = jnp.bfloat16

    def layer_norm(v, w, b):
        mu = jnp.mean(v, axis=-1, keepdims=True)
        var = jnp.mean((v - mu) ** 2, axis=-1, keepdims=True)
        return (v - mu) * jax.lax.rsqrt(var + eps) * w + b

    def split_heads(t):                                # (T, D) -> (H, T, dh)
        # Only a 2-D transpose + leading-dim reshape + last-two-dim swap
        # (all Mosaic-supported); no per-head lane slicing.
        return t.T.reshape(H, dh, T).transpose(0, 2, 1)

    def merge_heads(t):                                # (H, T, dh) -> (T, D)
        return t.transpose(0, 2, 1).reshape(D, T).T

    # --- MHSA on LayerNorm(x); bf16 MXU operands, f32 accumulation ---
    ln1 = layer_norm(x, ln1_w_ref[0], ln1_b_ref[0]).astype(bf16)
    q = jnp.dot(ln1, wq_ref[0], preferred_element_type=jnp.float32) + bq_ref[0]
    k = jnp.dot(ln1, wk_ref[0], preferred_element_type=jnp.float32) + bk_ref[0]
    v = jnp.dot(ln1, wv_ref[0], preferred_element_type=jnp.float32) + bv_ref[0]

    qh = split_heads(q).astype(bf16)
    kh = split_heads(k).astype(bf16)
    vh = split_heads(v).astype(bf16)

    scale = 1.0 / (dh ** 0.5)
    # Batched over all heads at once; contraction over the last dims avoids
    # an explicit k transpose.
    scores = jnp.einsum("htd,hsd->hts", qh, kh,
                        preferred_element_type=jnp.float32) * scale
    m = jnp.max(scores, axis=-1, keepdims=True)
    e = jnp.exp(scores - m)
    probs = e * pl.reciprocal(jnp.sum(e, axis=-1, keepdims=True), approx=True)
    ctx = jnp.einsum("hts,hsd->htd", probs.astype(bf16), vh,
                     preferred_element_type=jnp.float32)
    attn = merge_heads(ctx)                            # (T, D) f32

    res1 = x + attn

    # --- MLP on LayerNorm(res1) ---
    ln2 = layer_norm(res1, ln2_w_ref[0], ln2_b_ref[0]).astype(bf16)
    h1 = jnp.dot(ln2, w1_ref[0], preferred_element_type=jnp.float32) + b1_ref[0]
    h1 = jax.nn.gelu(h1, approximate=False)            # nn.GELU() = exact erf
    h2 = jnp.dot(h1.astype(bf16), w2_ref[0],
                 preferred_element_type=jnp.float32) + b2_ref[0]
    # TODO(synk): nn.Dropout(0.1) is identity (inference semantics).

    new_tokens = res1 + h2
    carry_ref[...] = new_tokens

    @pl.when(layer == n_layers - 1)
    def _():
        o_ref[0] = new_tokens                          # single HBM write/sample


def vit_blocks(tokens, bp, n_heads):
    N, T, D = tokens.shape
    L, _, Dm = bp["w1"].shape

    def lw(*dims):
        # Per-layer parameter stacked on a leading layer axis: fetch one
        # layer per grid step along the (last, "arbitrary") layer axis.
        nd = len(dims)
        return pl.BlockSpec((1,) + dims, lambda b, l: (l,) + (0,) * nd)

    kernel = functools.partial(vit_block_kernel, n_heads=n_heads)
    return pl.pallas_call(
        kernel,
        out_shape=jax.ShapeDtypeStruct((N, T, D), jnp.float32),
        grid=(N, L),
        in_specs=[
            pl.BlockSpec((1, T, D), lambda b, l: (b, 0, 0)),   # tokens (l==0)
            lw(1, D), lw(1, D),                                 # ln1 w, b
            lw(D, D), lw(1, D),                                 # Wq, bq
            lw(D, D), lw(1, D),                                 # Wk, bk
            lw(D, D), lw(1, D),                                 # Wv, bv
            lw(1, D), lw(1, D),                                 # ln2 w, b
            lw(D, Dm), lw(1, Dm),                               # W1, b1
            lw(Dm, D), lw(1, D),                                # W2, b2
        ],
        out_specs=pl.BlockSpec((1, T, D), lambda b, l: (b, 0, 0)),
        scratch_shapes=[pltpu.VMEM((T, D), jnp.float32)],       # token carry
        compiler_params=pltpu.CompilerParams(
            dimension_semantics=("parallel", "arbitrary"),
            vmem_limit_bytes=48 * 1024 * 1024,
        ),
    )(
        tokens,
        bp["ln1_w"], bp["ln1_b"],
        bp["wq"], bp["bq"], bp["wk"], bp["bk"], bp["wv"], bp["bv"],
        bp["ln2_w"], bp["ln2_b"],
        bp["w1"], bp["b1"], bp["w2"], bp["b2"],
    )


# ----------------------------------------------------------------------------
# Parameter init (deterministic, PyTorch nn.Linear-style uniform init;
# weights stored pre-transposed as (in, out); matmul weights cast to bf16,
# biases / LayerNorm params kept f32; per-layer weights stacked on axis 0).
# ----------------------------------------------------------------------------
def _dense_init(key, fan_in, fan_out):
    kw, kb = jax.random.split(key)
    bound = 1.0 / np.sqrt(fan_in)
    w = jax.random.uniform(kw, (fan_in, fan_out), jnp.float32, -bound, bound)
    b = jax.random.uniform(kb, (1, fan_out), jnp.float32, -bound, bound)
    return w, b


def init_vit_params(key, patch_dim, hidden_d, n_heads, n_blocks, mlp_ratio=4):
    assert hidden_d % n_heads == 0
    keys = jax.random.split(key, 2 + n_blocks)
    mapper_w, mapper_b = _dense_init(keys[0], patch_dim, hidden_d)
    class_token = jax.random.normal(keys[1], (1, 1, hidden_d), jnp.float32)

    acc = {k: [] for k in
           ("wq", "bq", "wk", "bk", "wv", "bv", "w1", "b1", "w2", "b2")}
    for bi in range(n_blocks):
        bk = jax.random.split(keys[2 + bi], 5)
        wq, bq = _dense_init(bk[0], hidden_d, hidden_d)
        wk, bkk = _dense_init(bk[1], hidden_d, hidden_d)
        wv, bv = _dense_init(bk[2], hidden_d, hidden_d)
        w1, b1 = _dense_init(bk[3], hidden_d, mlp_ratio * hidden_d)
        w2, b2 = _dense_init(bk[4], mlp_ratio * hidden_d, hidden_d)
        for name, val in (("wq", wq), ("bq", bq), ("wk", wk), ("bk", bkk),
                          ("wv", wv), ("bv", bv), ("w1", w1), ("b1", b1),
                          ("w2", w2), ("b2", b2)):
            acc[name].append(val)

    L = n_blocks
    bf16 = jnp.bfloat16
    blocks = dict(
        ln1_w=jnp.ones((L, 1, hidden_d), jnp.float32),
        ln1_b=jnp.zeros((L, 1, hidden_d), jnp.float32),
        wq=jnp.stack(acc["wq"]).astype(bf16), bq=jnp.stack(acc["bq"]),
        wk=jnp.stack(acc["wk"]).astype(bf16), bk=jnp.stack(acc["bk"]),
        wv=jnp.stack(acc["wv"]).astype(bf16), bv=jnp.stack(acc["bv"]),
        ln2_w=jnp.ones((L, 1, hidden_d), jnp.float32),
        ln2_b=jnp.zeros((L, 1, hidden_d), jnp.float32),
        w1=jnp.stack(acc["w1"]).astype(bf16), b1=jnp.stack(acc["b1"]),
        w2=jnp.stack(acc["w2"]).astype(bf16), b2=jnp.stack(acc["b2"]),
    )
    return dict(mapper_w=mapper_w.astype(bf16), mapper_b=mapper_b,
                class_token=class_token, blocks=blocks)


# ----------------------------------------------------------------------------
# Full ViT forward
# ----------------------------------------------------------------------------
def vit_forward(image_list, params, n_patches, n_heads):
    n = image_list.shape[0]
    hidden_d = params["class_token"].shape[-1]

    patches = patchify(image_list, n_patches)                   # (N, P, PD)
    N, P, PD = patches.shape
    mapped = linear_mapper(patches.reshape(N * P, PD),
                           params["mapper_w"], params["mapper_b"])
    patch_tokens = mapped.reshape(N, P, hidden_d)

    class_token = jnp.broadcast_to(params["class_token"], (n, 1, hidden_d))
    tokens = jnp.concatenate([class_token, patch_tokens], axis=1)   # (N, T, D)

    pe = get_positional_encoding(tokens.shape[1], hidden_d)
    tokens = tokens + pe

    tokens = vit_blocks(tokens, params["blocks"], n_heads)      # all layers

    return tokens[:, 0]                                          # (N, D)


# ----------------------------------------------------------------------------
if __name__ == "__main__":
    # Small config consistent with the module:
    #   chw = (3, 8, 8), n_patches = 2 -> patch_size = 4, patch_dim = 48
    #   hidden_d = 32, n_heads = 2, n_blocks = 2, batch N = 2, inner seq S = 2
    N, S, C, H, W = 2, 2, 3, 8, 8
    n_patches, n_blocks, hidden_d, n_heads = 2, 2, 32, 2
    patch_dim = C * (H // n_patches) * (W // n_patches)

    key = jax.random.PRNGKey(0)
    k_img, k_par = jax.random.split(key)

    image_list = jax.random.normal(k_img, (N, S, C, H, W), jnp.float32)
    params = init_vit_params(k_par, patch_dim, hidden_d, n_heads, n_blocks)

    out = vit_forward(image_list, params, n_patches, n_heads)
    out = jax.block_until_ready(out)

    assert out.shape == (N, hidden_d), out.shape
    assert bool(jnp.all(jnp.isfinite(out)))
    print("KERNEL_OK")
</pallas_src>

<mosaic_0001>
module attributes {stable_mosaic.version = 11 : i64} {
  func.func @linear_mapper_kernel(%arg0: i32, %arg1: memref<16x48xf32, #tpu.memory_space<vmem>>, %arg2: memref<48x32xbf16, #tpu.memory_space<vmem>>, %arg3: memref<1x32xf32, #tpu.memory_space<vmem>>, %arg4: memref<16x32xf32, #tpu.memory_space<vmem>>) attributes {dimension_semantics = [#tpu.dimension_semantics<parallel>], iteration_bounds = array<i64: 1>, scalar_prefetch = 0 : i64, scratch_operands = 0 : i64, tpu.core_type = #tpu.core_type<tc>, window_params = [{transform_indices = @transform_0, window_bounds = array<i64: 16, 48>}, {pipeline_mode = #tpu.pipeline_mode<synchronous>, transform_indices = @transform_1, window_bounds = array<i64: 48, 32>}, {pipeline_mode = #tpu.pipeline_mode<synchronous>, transform_indices = @transform_2, window_bounds = array<i64: 1, 32>}, {transform_indices = @transform_3, window_bounds = array<i64: 16, 32>}]} {
    %c0 = arith.constant 0 : index
    %c0_0 = arith.constant 0 : index
    %0 = vector.load %arg1[%c0, %c0_0] : memref<16x48xf32, #tpu.memory_space<vmem>>, vector<16x48xf32>
    %1 = arith.truncf %0 : vector<16x48xf32> to vector<16x48xbf16>
    %c0_1 = arith.constant 0 : index
    %c0_2 = arith.constant 0 : index
    %2 = vector.load %arg2[%c0_1, %c0_2] : memref<48x32xbf16, #tpu.memory_space<vmem>>, vector<48x32xbf16>
    %cst = arith.constant dense<0.000000e+00> : vector<16x32xf32>
    %3 = tpu.matmul %1, %2, %cst {dimension_numbers = #tpu.dot_dimension_numbers<[1], [0], [0], [1], [0, 0, 1, 1], [], []>} : vector<16x48xbf16>, vector<48x32xbf16>, vector<16x32xf32> -> vector<16x32xf32>
    %c0_3 = arith.constant 0 : index
    %c0_4 = arith.constant 0 : index
    %4 = vector.load %arg3[%c0_3, %c0_4] : memref<1x32xf32, #tpu.memory_space<vmem>>, vector<1x32xf32>
    %5 = vector.broadcast %4 : vector<1x32xf32> to vector<16x32xf32>
    %6 = arith.addf %3, %5 : vector<16x32xf32>
    %c0_5 = arith.constant 0 : index
    %c0_6 = arith.constant 0 : index
    %7 = vector.load %arg4[%c0_5, %c0_6] : memref<16x32xf32, #tpu.memory_space<vmem>>, vector<16x32xf32>
    tpu.vector_store %arg4[%c0_5, %c0_6], %6 {strides = array<i32>} : memref<16x32xf32, #tpu.memory_space<vmem>>, vector<16x32xf32>,
    return
  }
  func.func @transform_0(%arg0: i32) -> (i32, i32) {
    %c0_i32 = arith.constant 0 : i32
    %c0_i32_0 = arith.constant 0 : i32
    return %arg0, %c0_i32 : i32, i32
  }
  func.func @transform_1(%arg0: i32) -> (i32, i32) {
    %c0_i32 = arith.constant 0 : i32
    %c0_i32_0 = arith.constant 0 : i32
    %c0_i32_1 = arith.constant 0 : i32
    return %c0_i32, %c0_i32_0 : i32, i32
  }
  func.func @transform_2(%arg0: i32) -> (i32, i32) {
    %c0_i32 = arith.constant 0 : i32
    %c0_i32_0 = arith.constant 0 : i32
    %c0_i32_1 = arith.constant 0 : i32
    return %c0_i32, %c0_i32_0 : i32, i32
  }
  func.func @transform_3(%arg0: i32) -> (i32, i32) {
    %c0_i32 = arith.constant 0 : i32
    %c0_i32_0 = arith.constant 0 : i32
    return %arg0, %c0_i32 : i32, i32
  }
}

</mosaic_0001>

<llo_original>
// kernel: tpu_custom_call.1
$region0: #{tpu_custom_call.1}
  #allocation0 [shape = 'u32[]', space=smem, size = 0x4, offset = 0x4, fixed_abs, tag = 'smem constant byte address 0x4 - core index']
  #allocation1 [shape = 'u32[144,128]{1,0:T(1,128)}', space=vmem, size = 0x12000, scoped, tag = 'internal scratch']
  %s0 = inlined_call_operand.vmem [shape: f32[16,48], index: 0, kind: input, shape index: {}]
  %s1 = inlined_call_operand.vmem [shape: bf16[48,32], index: 1, kind: input, shape index: {}]
  %s2 = inlined_call_operand.vmem [shape: f32[1,32], index: 2, kind: input, shape index: {}]
  %s3 = inlined_call_operand.hbm [shape: f32[16,32], index: 3, kind: output, shape index: {}]
  %s4 = sld [smem:[#allocation0]]
  $region22: #{tpu_custom_call.1} parent=0
    _
  %s6 = ssub.s32 1, %s4
  %s7 = scalar_select 0, %s6, %s4
  $region1: #{tpu_custom_call.1} parent=0
    #allocation2 [shape = 'u8[8192]{0}', space=vmem, size = 0x2000, scoped, tag = 'output window, operand 0, single buffered']
    #allocation3 [shape = 's32[1]{0}', space=sflag, size = 0x4, scoped, tag = 'scoped memory for tpu_custom_call.1']
    %8 = vsyncpa [#allocation3], 0
    // Predicated region
    $region2: #{tpu_custom_call.1} parent=1 // pred_check
      _
    $region3: #{tpu_custom_call.1} parent=1 // pred_check_branch
      %10 = sbr.rel (0) target = $region5
    $region4: #{tpu_custom_call.1} parent=1 // pred_region
      _
    $region5: #{tpu_custom_call.1} parent=1 // pred_fallthru
      _
    // Predicated region
    $region6: #{tpu_custom_call.1} parent=1 // pred_check
      _
    $region7: #{tpu_custom_call.1} parent=1 // pred_check_branch
      %12 = sbr.rel (0) target = $region9
    $region8: #{tpu_custom_call.1} parent=1 // pred_region
      _
    $region9: #{tpu_custom_call.1} parent=1 // pred_fallthru
      _
    // Predicated region
    $region10: #{tpu_custom_call.1} parent=1 // pred_check
      _
    $region11: #{tpu_custom_call.1} parent=1 // pred_check_branch
      %14 = sbr.rel (0) target = $region13
    $region12: #{tpu_custom_call.1} parent=1 // pred_region
      _
    $region13: #{tpu_custom_call.1} parent=1 // pred_fallthru
      _
    %v16 = vld [vmem:[%s0] sm:$0xff]
    %v17 = vld [vmem:[%s0 + $0x8] sm:$0xff]
    %v18 = vpack.c.bf16 %v17, %v16
    %v19 = vld [vmem:[%s1] sm:$0xf]
    %v20 = vld [vmem:[%s1 + $0x4] sm:$0xf]
    %v21 = vld [vmem:[%s1 + $0x8] sm:$0xf]
    %v22 = vld [vmem:[%s1 + $0xc] sm:$0xf]
    %v23 = vld [vmem:[%s1 + $0x10] sm:$0xf]
    %v24 = vld [vmem:[%s1 + $0x14] sm:$0xf]
    %v25 = vld [vmem:[%s2] sm:$0x1]
    %v27 = vlaneseq
    %v28 = vshrl.u32 %v27, 7
    %v29 = vsub.s32 0, %v28
    %v30 = vrot.slane %v25, %v29
    %v38 = vunpack.c.l.b16 %v19
    %v39 = vunpack.c.l.b16 %v20
    %v40 = vunpack.c.l.b16 %v21
    %v41 = vunpack.c.l.b16 %v22
    %v42 = vunpack.c.l.b16 %v23
    %v43 = vunpack.c.l.b16 %v24
    %v44 = vpack.c.b16 %v39, %v38
    %v45 = vpack.c.b16 %v41, %v40
    %v46 = vpack.c.b16 %v43, %v42
    %vm50 = vcmask 392192
    %v52 = vsel %vm50, %v18, 0
    %54 = vmatprep.subr.bf16.mxu0 0
    %55 = vmatpush1.bf16.msra.mxu0 0
    %56 = vmatprep.subr.bf16.mxu0 0
    %57 = vmatpush1.bf16.msra.mxu0 0
    %58 = vmatprep.subr.bf16.mxu0 0
    %59 = vmatpush1.bf16.msra.mxu0 0
    %60 = vmatprep.subr.bf16.mxu0 0
    %61 = vmatpush1.bf16.msra.mxu0 0
    %62 = vmatprep.subr.bf16.mxu0 0
    %63 = vmatpush1.bf16.msra.mxu0 0
    %64 = vmatprep.subr.bf16.mxu0 0
    %65 = vmatpush1.bf16.msra.mxu0 %v46
    %66 = vmatprep.subr.bf16.mxu0 0
    %67 = vmatpush1.bf16.msra.mxu0 %v45
    %68 = vmatprep.subr.bf16.mxu0 0
    %69 = vmatpush1.bf16.msra.mxu0 %v44
    %70 = vmatprep.subr.bf16.mxu0 0
    %71 = vmatpush2.bf16.msra.mxu0 0
    %72 = vmatprep.subr.bf16.mxu0 0
    %73 = vmatpush2.bf16.msra.mxu0 0
    %74 = vmatprep.subr.bf16.mxu0 0
    %75 = vmatpush2.bf16.msra.mxu0 0
    %76 = vmatprep.subr.bf16.mxu0 0
    %77 = vmatpush2.bf16.msra.mxu0 0
    %78 = vmatprep.subr.bf16.mxu0 0
    %79 = vmatpush2.bf16.msra.mxu0 0
    %80 = vmatprep.subr.bf16.mxu0 0
    %81 = vmatpush2.bf16.msra.mxu0 0
    %82 = vmatprep.subr.bf16.mxu0 0
    %83 = vmatpush2.bf16.msra.mxu0 0
    %84 = vmatprep.subr.bf16.mxu0 0
    %85 = vmatpush2.bf16.msra.mxu0 0
    %86 = vmatprep.mubr.bf16.mxu0 0
    %87 = vmatmul.mubr.bf16.gmra.mxu0 %v52
    %v88 = vpop.f32.mrf.mxu0
    %v89 = vadd.f32 %v30, %v88
    %v90 = vpop.f32.mrf.mxu0
    %v91 = vpop.f32.mrf.mxu0
    %v92 = vadd.f32 %v30, %v91
    %v93 = vpop.f32.mrf.mxu0
    %94 = vdwg.mxu0
    %vm95 = vcmask 261120
    %96 = vst.msk [vmem:[#allocation2] sm:$0xff] %vm95, %v89
    %97 = vst.msk [vmem:[#allocation2 + $0x8] sm:$0xff] %vm95, %v92
    // Predicated region
    $region14: #{tpu_custom_call.1} parent=1 // pred_check
      _
    $region15: #{tpu_custom_call.1} parent=1 // pred_check_branch
      %99 = sbr.rel (0) target = $region17
    $region16: #{tpu_custom_call.1} parent=1 // pred_region
      %s101 = ssub.s32 256, 256
      %102 = vsyncadd [#allocation3], %s101
      %s103 = sshll.u32 [#allocation2], 4
      %s104 = int_to_ptr.vmem [resolvable:$true] %s103
      %109 = dma.vmem_to_hbm [thread:$0]  %s104, 256, %s3, [#allocation3], 128, 128, 8
    $region17: #{tpu_custom_call.1} parent=1 // pred_fallthru
      _
    // Predicated region
    $region18: #{tpu_custom_call.1} parent=1 // pred_check
      _
    $region19: #{tpu_custom_call.1} parent=1 // pred_check_branch
      %111 = sbr.rel (0) target = $region21
    $region20: #{tpu_custom_call.1} parent=1 // pred_region
      %112 = dma.done [#allocation3], 256
    $region21: #{tpu_custom_call.1} parent=1 // pred_fallthru
      _
    %113 = vsyncpa [#allocation3], 1

</llo_original>
